<compile_context>
chip_gen: v7x
topology: tpu7x:2x2x1
jax: 0.10.0
libtpu: 0.0.40
codegen_flags: <defaults>
</compile_context>

<pallas_src>
import functools
import math

import jax
import jax.numpy as jnp
import numpy as np
from jax.experimental import pallas as pl
from jax.experimental.pallas import tpu as pltpu

# ----------------------------- configuration --------------------------------
FOCAL_LEVELS = [2, 3, 5]      # sorted, unique, all >= 2 (so sliced len == L)
DIM = 4                       # channels
BATCH = 2
LENGTH = 16
NEG_SLOPE = 0.01              # torch.nn.LeakyReLU default
K_MAX = max(FOCAL_LEVELS)
NL = len(FOCAL_LEVELS)
LANES = 128

# Packed parameter-tile column layout (one (BC, 128) f32 tile):
#   column W_OFF + i*K_MAX + j : tap j of level i (zero for j >= kl_i)
#   column B_OFF + i           : bias of level i
#   column M_OFF + i           : RAW memory of level i (softmax done in-kernel)
W_OFF = 0
B_OFF = NL * K_MAX
M_OFF = B_OFF + NL
P_USED = M_OFF + NL
P_COLS = LANES
assert P_USED <= P_COLS

# Distinct lane shifts across all (level, tap) pairs:
#   out[p] += w[j] * x[p + s],  s = ceil(kl/2) - j
_SHIFTS = sorted({int(math.ceil(kl / 2)) - j
                  for kl in FOCAL_LEVELS for j in range(kl)})
_MAX_POS_SHIFT = max(_SHIFTS)

# Force-zero mask for unused taps, applied during packing so correctness does
# not depend on the caller zeroing them.
_TAP_MASK = np.zeros((NL, 1, K_MAX), dtype=np.float32)
for _i, _kl in enumerate(FOCAL_LEVELS):
    _TAP_MASK[_i, 0, :_kl] = 1.0


def _round_up(v, m):
    return (v + m - 1) // m * m


# ------------------------------- Pallas kernel -------------------------------
def effect_modulation_kernel(x_ref, p_ref, o_ref, *, L, W):
    # x_ref : (BC, L)       input rows ordered b*C + c
    # p_ref : (BC, P_COLS)  packed params: taps | biases | raw memory | 0-pad
    # o_ref : (BC, L)
    BC = x_ref.shape[0]
    x = x_ref[...]
    p = p_ref[...]

    # Zero-pad the working copy to a lane-dense width W (128-multiple,
    # >= L + max positive shift, and > L).  The pad lives only in vregs, so
    # rolled (wrapped) reads land in zeros and no edge masks are needed —
    # while the HBM-side tensors stay un-padded.
    xw = jnp.concatenate([x, jnp.zeros((BC, W - L), x.dtype)], axis=-1)

    # Distinct lane-shifted copies of x, each emitted exactly once (XLU slot,
    # overlaps with the VPU tap FMAs).  NOTE(production): at >=512-lane tiles,
    # read shifted slices from a K_MAX-halo'd VMEM tile via pl.ds instead of
    # materializing all copies (vreg pressure).
    x_shift = {0: xw}
    for s in _SHIFTS:
        if s != 0:
            x_shift[s] = pltpu.roll(xw, shift=(-s) % W, axis=1)

    # softmax(memory) gate over the NL packed columns — purely elementwise on
    # (BC, 1) slices, no cross-lane reduce required.
    m_cols = [p[:, M_OFF + i:M_OFF + i + 1] for i in range(NL)]     # (BC,1) each
    m_max = m_cols[0]
    for c in m_cols[1:]:
        m_max = jnp.maximum(m_max, c)
    e_cols = [jnp.exp(c - m_max) for c in m_cols]                   # EUP
    denom = e_cols[0]
    for e in e_cols[1:]:
        denom = denom + e
    inv_denom = 1.0 / denom

    acc = jnp.zeros((BC, W), jnp.float32)
    for i, kl in enumerate(FOCAL_LEVELS):            # static unroll over levels
        start = int(math.ceil(kl / 2))
        conv = jnp.zeros((BC, W), jnp.float32)
        for j in range(kl):                          # static unroll over taps
            # ConvTranspose1d (stride 1, depthwise) sliced [start:start+L]:
            #   out[p] = bias + sum_j w[j] * x[p + start - j]
            s = start - j
            col = W_OFF + i * K_MAX + j
            conv = conv + p[:, col:col + 1] * x_shift[s]            # (BC,1)*(BC,W)
        conv = conv + p[:, B_OFF + i:B_OFF + i + 1]                 # + bias
        act = jnp.maximum(conv, NEG_SLOPE * conv)                   # LeakyReLU
        acc = acc + (e_cols[i] * inv_denom) * act                   # gate + sum

    # Store at the true width; positions >= L of `acc` are garbage and never
    # written (single accumulated store — keep it single when tiling W).
    o_ref[...] = acc[:, :L].astype(o_ref.dtype)


# --------------------------------- wrapper -----------------------------------
@jax.jit
def effect_modulation_1d(x, weights, biases, memory):
    """x: (B, C, L) f32.  weights: (NL, C, K_MAX) (taps >= kl ignored).
    biases: (NL, C).  memory: (C, NL) raw parameter (softmax inside kernel)."""
    B, C, L = x.shape
    BC = B * C
    # Lane-dense in-vreg working width: 128-multiple with enough slack that
    # every rolled (wrapped) read lands in the zero padding.
    W = _round_up(L + _MAX_POS_SHIFT, LANES)

    # Config guards (the roll+zero-pad trick and packed layout rely on these).
    assert list(FOCAL_LEVELS) == sorted(set(FOCAL_LEVELS)), "levels must be sorted/unique"
    assert min(FOCAL_LEVELS) >= 2, "focal levels must be >= 2 (slice length == L)"
    assert weights.shape == (NL, C, K_MAX)
    assert biases.shape == (NL, C)
    assert memory.shape == (C, NL)
    assert W > L and W >= L + _MAX_POS_SHIFT and W % LANES == 0

    # ---- pack ALL parameters into ONE lane-dense (BC, 128) tile -------------
    # Row ordering is b*C + c, matching x.reshape(BC, L) below.
    w_cols = jnp.transpose(weights * jnp.asarray(_TAP_MASK), (1, 0, 2))  # (C,NL,K_MAX)
    w_cols = w_cols.reshape(C, NL * K_MAX)                               # (C, NL*K_MAX)
    b_cols = jnp.transpose(biases, (1, 0))                               # (C, NL)
    m_cols = memory                                                      # (C, NL) raw
    p_c = jnp.concatenate([w_cols, b_cols, m_cols], axis=-1)            # (C, P_USED)
    p_c = jnp.pad(p_c, ((0, 0), (0, P_COLS - P_USED)))                  # (C, 128)
    params = jnp.tile(p_c, (B, 1))                                      # (BC, 128)

    # Data path: only a (free) collapse-reshape, no pad, no slice.
    x2d = x.reshape(BC, L)

    # Whole (toy-sized) problem in one VMEM block -> no grid, zero per-step
    # overhead.  NOTE(production): grid over BC row-tiles / >=512-lane W-tiles
    # (half-size tiles on v7x, 64 MiB VMEM), dimension_semantics=("parallel",..)
    # so v7x uses both TensorCores, bf16 I/O with f32 accumulation.
    vmem = pl.BlockSpec(memory_space=pltpu.MemorySpace.VMEM)
    kernel = functools.partial(effect_modulation_kernel, L=L, W=W)
    out = pl.pallas_call(
        kernel,
        out_shape=jax.ShapeDtypeStruct((BC, L), x.dtype),
        in_specs=[vmem, vmem],
        out_specs=vmem,
        compiler_params=pltpu.CompilerParams(
            # Let XLA fuse the trivial reshape / parameter-packing producers
            # into the pallas_call instead of dispatching them separately.
            allow_input_fusion=[True, True],
        ),
    )(x2d, params)
    return out.reshape(B, C, L)


# ----------------------------- pure-JAX reference ----------------------------
def reference_forward(x, weights, biases, memory):
    B, C, L = x.shape
    mem = jax.nn.softmax(memory, axis=-1)                      # (C, NL)
    out = jnp.zeros_like(x)
    for i, kl in enumerate(FOCAL_LEVELS):
        w = weights[i][:, :kl]                                 # (C, kl)
        # ConvTranspose1d (stride 1, depthwise) == correlation with reversed
        # kernel and (kl-1, kl-1) padding.
        rhs = w[:, ::-1][:, None, :]                           # (O=C, I/g=1, W=kl)
        y = jax.lax.conv_general_dilated(
            x, rhs, window_strides=(1,), padding=[(kl - 1, kl - 1)],
            dimension_numbers=("NCH", "OIH", "NCH"), feature_group_count=C)
        y = y + biases[i][None, :, None]
        start = int(math.ceil(kl / 2))
        y = y[:, :, start:start + L]
        y = jnp.where(y > 0, y, NEG_SLOPE * y)
        out = out + mem[:, i][None, :, None] * y
    return out


# ----------------------------------- main ------------------------------------
if __name__ == "__main__":
    key = jax.random.PRNGKey(0)
    k_x, k_w, k_b, k_m = jax.random.split(key, 4)

    x = jax.random.normal(k_x, (BATCH, DIM, LENGTH), dtype=jnp.float32)

    # Synthetic parameters matching the PyTorch module shapes.
    # ConvTranspose1d(dim, dim, kl, groups=dim) weight (dim, 1, kl) stored as
    # rows of a (NL, dim, K_MAX) tensor (unused taps ignored by the kernel).
    w_full = 0.1 * jax.random.normal(k_w, (NL, DIM, K_MAX), dtype=jnp.float32)
    weights = w_full * jnp.asarray(_TAP_MASK)
    biases = 0.05 * jax.random.normal(k_b, (NL, DIM), dtype=jnp.float32)
    # init_memory = 1 plus a small perturbation so the softmax gate is
    # exercised non-trivially.
    memory = jnp.ones((DIM, NL), dtype=jnp.float32) \
        + 0.1 * jax.random.normal(k_m, (DIM, NL), dtype=jnp.float32)

    out = jax.block_until_ready(effect_modulation_1d(x, weights, biases, memory))
    ref = jax.block_until_ready(reference_forward(x, weights, biases, memory))
    np.testing.assert_allclose(np.asarray(out), np.asarray(ref), rtol=1e-5, atol=1e-5)

    print("KERNEL_OK")
</pallas_src>

<mosaic_0001>
module attributes {stable_mosaic.version = 11 : i64} {
  func.func @effect_modulation_kernel(%arg0: memref<8x16xf32, #tpu.memory_space<vmem>>, %arg1: memref<8x128xf32, #tpu.memory_space<vmem>>, %arg2: memref<8x16xf32, #tpu.memory_space<vmem>>) attributes {dimension_semantics = [], scalar_prefetch = 0 : i64, scratch_operands = 0 : i64, tpu.core_type = #tpu.core_type<tc>} {
    %c0 = arith.constant 0 : index
    %c0_0 = arith.constant 0 : index
    %0 = vector.load %arg0[%c0, %c0_0] : memref<8x16xf32, #tpu.memory_space<vmem>>, vector<8x16xf32>
    %c0_1 = arith.constant 0 : index
    %c0_2 = arith.constant 0 : index
    %1 = vector.load %arg1[%c0_1, %c0_2] : memref<8x128xf32, #tpu.memory_space<vmem>>, vector<8x128xf32>
    %cst = arith.constant 0.000000e+00 : f32
    %2 = vector.broadcast %cst : f32 to vector<8x112xf32>
    %3 = tpu.concatenate %0, %2 in 1 : vector<8x16xf32>, vector<8x112xf32> -> vector<8x128xf32>
    %c1_i32 = arith.constant 1 : i32
    %4 = tpu.dynamic_rotate %3 by %c1_i32 dim 1 : vector<8x128xf32>, i32 -> vector<8x128xf32>
    %c127_i32 = arith.constant 127 : i32
    %5 = tpu.dynamic_rotate %3 by %c127_i32 dim 1 : vector<8x128xf32>, i32 -> vector<8x128xf32>
    %c126_i32 = arith.constant 126 : i32
    %6 = tpu.dynamic_rotate %3 by %c126_i32 dim 1 : vector<8x128xf32>, i32 -> vector<8x128xf32>
    %c125_i32 = arith.constant 125 : i32
    %7 = tpu.dynamic_rotate %3 by %c125_i32 dim 1 : vector<8x128xf32>, i32 -> vector<8x128xf32>
    %8 = vector.extract_strided_slice %1 {offsets = [0, 18], sizes = [8, 1], strides = [1, 1]} : vector<8x128xf32> to vector<8x1xf32>
    %9 = vector.extract_strided_slice %1 {offsets = [0, 19], sizes = [8, 1], strides = [1, 1]} : vector<8x128xf32> to vector<8x1xf32>
    %10 = vector.extract_strided_slice %1 {offsets = [0, 20], sizes = [8, 1], strides = [1, 1]} : vector<8x128xf32> to vector<8x1xf32>
    %11 = arith.maximumf %8, %9 : vector<8x1xf32>
    %12 = arith.maximumf %11, %10 : vector<8x1xf32>
    %13 = arith.subf %8, %12 : vector<8x1xf32>
    %14 = math.exp %13 : vector<8x1xf32>
    %15 = arith.subf %9, %12 : vector<8x1xf32>
    %16 = math.exp %15 : vector<8x1xf32>
    %17 = arith.subf %10, %12 : vector<8x1xf32>
    %18 = math.exp %17 : vector<8x1xf32>
    %19 = arith.addf %14, %16 : vector<8x1xf32>
    %20 = arith.addf %19, %18 : vector<8x1xf32>
    %cst_3 = arith.constant 1.000000e+00 : f32
    %21 = vector.broadcast %cst_3 : f32 to vector<8x1xf32>
    %22 = arith.divf %21, %20 : vector<8x1xf32>
    %cst_4 = arith.constant 0.000000e+00 : f32
    %23 = vector.broadcast %cst_4 : f32 to vector<8x128xf32>
    %cst_5 = arith.constant 0.000000e+00 : f32
    %24 = vector.broadcast %cst_5 : f32 to vector<8x128xf32>
    %25 = vector.extract_strided_slice %1 {offsets = [0, 0], sizes = [8, 1], strides = [1, 1]} : vector<8x128xf32> to vector<8x1xf32>
    %26 = vector.broadcast %25 : vector<8x1xf32> to vector<8x128xf32>
    %27 = arith.mulf %26, %5 : vector<8x128xf32>
    %28 = arith.addf %24, %27 : vector<8x128xf32>
    %29 = vector.extract_strided_slice %1 {offsets = [0, 1], sizes = [8, 1], strides = [1, 1]} : vector<8x128xf32> to vector<8x1xf32>
    %30 = vector.broadcast %29 : vector<8x1xf32> to vector<8x128xf32>
    %31 = arith.mulf %30, %3 : vector<8x128xf32>
    %32 = arith.addf %28, %31 : vector<8x128xf32>
    %33 = vector.extract_strided_slice %1 {offsets = [0, 15], sizes = [8, 1], strides = [1, 1]} : vector<8x128xf32> to vector<8x1xf32>
    %34 = vector.broadcast %33 : vector<8x1xf32> to vector<8x128xf32>
    %35 = arith.addf %32, %34 : vector<8x128xf32>
    %cst_6 = arith.constant 0.00999999977 : f32
    %36 = vector.broadcast %cst_6 : f32 to vector<8x128xf32>
    %37 = arith.mulf %36, %35 : vector<8x128xf32>
    %38 = arith.maximumf %35, %37 : vector<8x128xf32>
    %39 = arith.mulf %14, %22 : vector<8x1xf32>
    %40 = vector.broadcast %39 : vector<8x1xf32> to vector<8x128xf32>
    %41 = arith.mulf %40, %38 : vector<8x128xf32>
    %42 = arith.addf %23, %41 : vector<8x128xf32>
    %cst_7 = arith.constant 0.000000e+00 : f32
    %43 = vector.broadcast %cst_7 : f32 to vector<8x128xf32>
    %44 = vector.extract_strided_slice %1 {offsets = [0, 5], sizes = [8, 1], strides = [1, 1]} : vector<8x128xf32> to vector<8x1xf32>
    %45 = vector.broadcast %44 : vector<8x1xf32> to vector<8x128xf32>
    %46 = arith.mulf %45, %6 : vector<8x128xf32>
    %47 = arith.addf %43, %46 : vector<8x128xf32>
    %48 = vector.extract_strided_slice %1 {offsets = [0, 6], sizes = [8, 1], strides = [1, 1]} : vector<8x128xf32> to vector<8x1xf32>
    %49 = vector.broadcast %48 : vector<8x1xf32> to vector<8x128xf32>
    %50 = arith.mulf %49, %5 : vector<8x128xf32>
    %51 = arith.addf %47, %50 : vector<8x128xf32>
    %52 = vector.extract_strided_slice %1 {offsets = [0, 7], sizes = [8, 1], strides = [1, 1]} : vector<8x128xf32> to vector<8x1xf32>
    %53 = vector.broadcast %52 : vector<8x1xf32> to vector<8x128xf32>
    %54 = arith.mulf %53, %3 : vector<8x128xf32>
    %55 = arith.addf %51, %54 : vector<8x128xf32>
    %56 = vector.extract_strided_slice %1 {offsets = [0, 16], sizes = [8, 1], strides = [1, 1]} : vector<8x128xf32> to vector<8x1xf32>
    %57 = vector.broadcast %56 : vector<8x1xf32> to vector<8x128xf32>
    %58 = arith.addf %55, %57 : vector<8x128xf32>
    %cst_8 = arith.constant 0.00999999977 : f32
    %59 = vector.broadcast %cst_8 : f32 to vector<8x128xf32>
    %60 = arith.mulf %59, %58 : vector<8x128xf32>
    %61 = arith.maximumf %58, %60 : vector<8x128xf32>
    %62 = arith.mulf %16, %22 : vector<8x1xf32>
    %63 = vector.broadcast %62 : vector<8x1xf32> to vector<8x128xf32>
    %64 = arith.mulf %63, %61 : vector<8x128xf32>
    %65 = arith.addf %42, %64 : vector<8x128xf32>
    %cst_9 = arith.constant 0.000000e+00 : f32
    %66 = vector.broadcast %cst_9 : f32 to vector<8x128xf32>
    %67 = vector.extract_strided_slice %1 {offsets = [0, 10], sizes = [8, 1], strides = [1, 1]} : vector<8x128xf32> to vector<8x1xf32>
    %68 = vector.broadcast %67 : vector<8x1xf32> to vector<8x128xf32>
    %69 = arith.mulf %68, %7 : vector<8x128xf32>
    %70 = arith.addf %66, %69 : vector<8x128xf32>
    %71 = vector.extract_strided_slice %1 {offsets = [0, 11], sizes = [8, 1], strides = [1, 1]} : vector<8x128xf32> to vector<8x1xf32>
    %72 = vector.broadcast %71 : vector<8x1xf32> to vector<8x128xf32>
    %73 = arith.mulf %72, %6 : vector<8x128xf32>
    %74 = arith.addf %70, %73 : vector<8x128xf32>
    %75 = vector.extract_strided_slice %1 {offsets = [0, 12], sizes = [8, 1], strides = [1, 1]} : vector<8x128xf32> to vector<8x1xf32>
    %76 = vector.broadcast %75 : vector<8x1xf32> to vector<8x128xf32>
    %77 = arith.mulf %76, %5 : vector<8x128xf32>
    %78 = arith.addf %74, %77 : vector<8x128xf32>
    %79 = vector.extract_strided_slice %1 {offsets = [0, 13], sizes = [8, 1], strides = [1, 1]} : vector<8x128xf32> to vector<8x1xf32>
    %80 = vector.broadcast %79 : vector<8x1xf32> to vector<8x128xf32>
    %81 = arith.mulf %80, %3 : vector<8x128xf32>
    %82 = arith.addf %78, %81 : vector<8x128xf32>
    %83 = vector.extract_strided_slice %1 {offsets = [0, 14], sizes = [8, 1], strides = [1, 1]} : vector<8x128xf32> to vector<8x1xf32>
    %84 = vector.broadcast %83 : vector<8x1xf32> to vector<8x128xf32>
    %85 = arith.mulf %84, %4 : vector<8x128xf32>
    %86 = arith.addf %82, %85 : vector<8x128xf32>
    %87 = vector.extract_strided_slice %1 {offsets = [0, 17], sizes = [8, 1], strides = [1, 1]} : vector<8x128xf32> to vector<8x1xf32>
    %88 = vector.broadcast %87 : vector<8x1xf32> to vector<8x128xf32>
    %89 = arith.addf %86, %88 : vector<8x128xf32>
    %cst_10 = arith.constant 0.00999999977 : f32
    %90 = vector.broadcast %cst_10 : f32 to vector<8x128xf32>
    %91 = arith.mulf %90, %89 : vector<8x128xf32>
    %92 = arith.maximumf %89, %91 : vector<8x128xf32>
    %93 = arith.mulf %18, %22 : vector<8x1xf32>
    %94 = vector.broadcast %93 : vector<8x1xf32> to vector<8x128xf32>
    %95 = arith.mulf %94, %92 : vector<8x128xf32>
    %96 = arith.addf %65, %95 : vector<8x128xf32>
    %97 = vector.extract_strided_slice %96 {offsets = [0, 0], sizes = [8, 16], strides = [1, 1]} : vector<8x128xf32> to vector<8x16xf32>
    %c0_11 = arith.constant 0 : index
    %c0_12 = arith.constant 0 : index
    %98 = vector.load %arg2[%c0_11, %c0_12] : memref<8x16xf32, #tpu.memory_space<vmem>>, vector<8x16xf32>
    tpu.vector_store %arg2[%c0_11, %c0_12], %97 {strides = array<i32>} : memref<8x16xf32, #tpu.memory_space<vmem>>, vector<8x16xf32>,
    return
  }
}

</mosaic_0001>

<llo_original>
// kernel: effect_modulation_1d.1
$region0: #{effect_modulation_1d.1}
  #allocation0 [shape = 'u32[]', space=smem, size = 0x4, offset = 0x4, fixed_abs, tag = 'smem constant byte address 0x4 - core index']
  #allocation1 [shape = 'u32[144,128]{1,0:T(1,128)}', space=vmem, size = 0x12000, scoped, tag = 'internal scratch']
  %s0 = inlined_call_operand.vmem [shape: f32[8,16], index: 0, kind: input, shape index: {}]
  %s1 = inlined_call_operand.vmem [shape: f32[8,128], index: 1, kind: input, shape index: {}]
  %s2 = inlined_call_operand.hbm [shape: f32[8,16], index: 2, kind: output, shape index: {}]
  %s3 = sld [smem:[#allocation0]]
  $region18: #{effect_modulation_1d.1} parent=0
    _
  %s5 = ssub.s32 1, %s3
  %s6 = scalar_select 0, %s5, %s3
  $region1: #{effect_modulation_1d.1} parent=0
    #allocation2 [shape = 'u8[4096]{0}', space=vmem, size = 0x1000, scoped, tag = 'output window, operand 0, single buffered']
    #allocation3 [shape = 's32[1]{0}', space=sflag, size = 0x4, scoped, tag = 'scoped memory for effect_modulation_1d.1']
    %7 = vsyncpa [#allocation3], 0
    // Predicated region
    $region2: #{effect_modulation_1d.1} parent=1 // pred_check
      _
    $region3: #{effect_modulation_1d.1} parent=1 // pred_check_branch
      %9 = sbr.rel (0) target = $region5
    $region4: #{effect_modulation_1d.1} parent=1 // pred_region
      _
    $region5: #{effect_modulation_1d.1} parent=1 // pred_fallthru
      _
    // Predicated region
    $region6: #{effect_modulation_1d.1} parent=1 // pred_check
      _
    $region7: #{effect_modulation_1d.1} parent=1 // pred_check_branch
      %11 = sbr.rel (0) target = $region9
    $region8: #{effect_modulation_1d.1} parent=1 // pred_region
      _
    $region9: #{effect_modulation_1d.1} parent=1 // pred_fallthru
      _
    %v12 = vld [vmem:[%s0] sm:$0xff]
    %v13 = vld [vmem:[%s1] sm:$0xff]
    %vm14 = vcmask 130048
    %v15 = vsel %vm14, %v12, 0.0
    %16 = vrot.lane.b32.xlu0 %v15, 1
    %v17 = vpop.permute.xlu0 %16
    %18 = vrot.lane.b32.xlu0 %v15, 127
    %v19 = vpop.permute.xlu0 %18
    %20 = vrot.lane.b32.xlu0 %v15, 126
    %v21 = vpop.permute.xlu0 %20
    %22 = vrot.lane.b32.xlu0 %v15, 125
    %v23 = vpop.permute.xlu0 %22
    %25 = vrot.lane.b32.xlu0 %v13, 127
    %v26 = vpop.permute.xlu0 %25
    %v28 = vmax.f32 %v13, %v26
    %29 = vrot.lane.b32.xlu0 %v13, 126
    %v30 = vpop.permute.xlu0 %29
    %v32 = vmax.f32 %v28, %v30
    %v33 = vsub.f32 %v13, %v32
    %v34 = vmul.f32 %v33, 1.442695
    %v35 = vpow.pop %v34
    %37 = vrot.lane.b32.xlu0 %v32, 1
    %v38 = vpop.permute.xlu0 %37
    %v40 = vsub.f32 %v13, %v38
    %v41 = vmul.f32 %v40, 1.442695
    %v42 = vpow.pop %v41
    %43 = vrot.lane.b32.xlu0 %v32, 2
    %v44 = vpop.permute.xlu0 %43
    %v46 = vsub.f32 %v13, %v44
    %v47 = vmul.f32 %v46, 1.442695
    %v48 = vpow.pop %v47
    %50 = vrot.lane.b32.xlu0 %v42, 127
    %v51 = vpop.permute.xlu0 %50
    %v53 = vadd.f32 %v35, %v51
    %55 = vrot.lane.b32.xlu0 %v48, 126
    %v56 = vpop.permute.xlu0 %55
    %v58 = vadd.f32 %v53, %v56
    %v59 = vrcp.pop %v58
    %v60 = vmul.f32 1.0, %v59
    %61 = vset.pattern.permute.xlu0 0
    %62 = vperm.xlu0 %61, %v13
    %v63 = vpop.permute.xlu0 %62
    %v65 = vmul.f32 %v63, %v19
    %v66 = vadd.f32 %v65, 0.0
    %67 = vset.pattern.permute.xlu0 1
    %68 = vperm.xlu0 %67, %v13
    %v69 = vpop.permute.xlu0 %68
    %v71 = vmul.f32 %v69, %v15
    %v72 = vadd.f32 %v66, %v71
    %73 = vset.pattern.permute.xlu0 15
    %74 = vperm.xlu0 %73, %v13
    %v75 = vpop.permute.xlu0 %74
    %v77 = vadd.f32 %v72, %v75
    %v78 = vmul.f32 %v77, 0.01
    %v79 = vmax.f32 %v77, %v78
    %v80 = vmul.f32 %v35, %v60
    %82 = vset.pattern.permute.xlu0 18
    %83 = vperm.xlu0 %82, %v80
    %v84 = vpop.permute.xlu0 %83
    %v86 = vmul.f32 %v84, %v79
    %v87 = vadd.f32 %v86, 0.0
    %88 = vset.pattern.permute.xlu0 5
    %89 = vperm.xlu0 %88, %v13
    %v90 = vpop.permute.xlu0 %89
    %v92 = vmul.f32 %v90, %v21
    %v93 = vadd.f32 %v92, 0.0
    %94 = vset.pattern.permute.xlu0 6
    %95 = vperm.xlu0 %94, %v13
    %v96 = vpop.permute.xlu0 %95
    %v98 = vmul.f32 %v96, %v19
    %v99 = vadd.f32 %v93, %v98
    %100 = vset.pattern.permute.xlu0 7
    %101 = vperm.xlu0 %100, %v13
    %v102 = vpop.permute.xlu0 %101
    %v104 = vmul.f32 %v102, %v15
    %v105 = vadd.f32 %v99, %v104
    %106 = vset.pattern.permute.xlu0 16
    %107 = vperm.xlu0 %106, %v13
    %v108 = vpop.permute.xlu0 %107
    %v110 = vadd.f32 %v105, %v108
    %v111 = vmul.f32 %v110, 0.01
    %v112 = vmax.f32 %v110, %v111
    %114 = vrot.lane.b32.xlu0 %v60, 1
    %v115 = vpop.permute.xlu0 %114
    %v117 = vmul.f32 %v42, %v115
    %119 = vset.pattern.permute.xlu0 19
    %120 = vperm.xlu0 %119, %v117
    %v121 = vpop.permute.xlu0 %120
    %v123 = vmul.f32 %v121, %v112
    %v124 = vadd.f32 %v87, %v123
    %125 = vset.pattern.permute.xlu0 10
    %126 = vperm.xlu0 %125, %v13
    %v127 = vpop.permute.xlu0 %126
    %v129 = vmul.f32 %v127, %v23
    %v130 = vadd.f32 %v129, 0.0
    %131 = vset.pattern.permute.xlu0 11
    %132 = vperm.xlu0 %131, %v13
    %v133 = vpop.permute.xlu0 %132
    %v135 = vmul.f32 %v133, %v21
    %v136 = vadd.f32 %v130, %v135
    %137 = vset.pattern.permute.xlu0 12
    %138 = vperm.xlu0 %137, %v13
    %v139 = vpop.permute.xlu0 %138
    %v141 = vmul.f32 %v139, %v19
    %v142 = vadd.f32 %v136, %v141
    %143 = vset.pattern.permute.xlu0 13
    %144 = vperm.xlu0 %143, %v13
    %v145 = vpop.permute.xlu0 %144
    %v147 = vmul.f32 %v145, %v15
    %v148 = vadd.f32 %v142, %v147
    %149 = vset.pattern.permute.xlu0 14
    %150 = vperm.xlu0 %149, %v13
    %v151 = vpop.permute.xlu0 %150
    %v153 = vmul.f32 %v151, %v17
    %v154 = vadd.f32 %v148, %v153
    %155 = vset.pattern.permute.xlu0 17
    %156 = vperm.xlu0 %155, %v13
    %v157 = vpop.permute.xlu0 %156
    %v159 = vadd.f32 %v154, %v157
    %v160 = vmul.f32 %v159, 0.01
    %v161 = vmax.f32 %v159, %v160
    %162 = vrot.lane.b32.xlu0 %v60, 2
    %v163 = vpop.permute.xlu0 %162
    %v165 = vmul.f32 %v48, %v163
    %167 = vset.pattern.permute.xlu0 20
    %168 = vperm.xlu0 %167, %v165
    %v169 = vpop.permute.xlu0 %168
    %v171 = vmul.f32 %v169, %v161
    %v172 = vadd.f32 %v124, %v171
    %173 = vst.msk [vmem:[#allocation2] sm:$0xff] %vm14, %v172
    // Predicated region
    $region10: #{effect_modulation_1d.1} parent=1 // pred_check
      _
    $region11: #{effect_modulation_1d.1} parent=1 // pred_check_branch
      %175 = sbr.rel (0) target = $region13
    $region12: #{effect_modulation_1d.1} parent=1 // pred_region
      %s177 = ssub.s32 128, 128
      %178 = vsyncadd [#allocation3], %s177
      %s180 = sshll.u32 [#allocation2], 4
      %s181 = int_to_ptr.vmem [resolvable:$true] %s180
      %183 = dma.vmem_to_hbm [thread:$0]  %s181, 128, %s2, [#allocation3]
    $region13: #{effect_modulation_1d.1} parent=1 // pred_fallthru
      _
    // Predicated region
    $region14: #{effect_modulation_1d.1} parent=1 // pred_check
      _
    $region15: #{effect_modulation_1d.1} parent=1 // pred_check_branch
      %185 = sbr.rel (0) target = $region17
    $region16: #{effect_modulation_1d.1} parent=1 // pred_region
      %186 = dma.done [#allocation3], 128
    $region17: #{effect_modulation_1d.1} parent=1 // pred_fallthru
      _
    %187 = vsyncpa [#allocation3], 1

</llo_original>
